<compile_context>
chip_gen: v5e
topology: v5e:2x2
jax: 0.10.0
libtpu: 0.0.40
codegen_flags: <defaults>
</compile_context>

<pallas_src>
import jax
import jax.numpy as jnp
from jax.experimental import pallas as pl
from jax.experimental.pallas import tpu as pltpu

_LANES = 128
_MAX_ROWS_PER_TILE = 1024  # 1024*128 lanes/tile -> ~1.5 MiB double-buffered/step


def _mlp_kernel(w1_ref, b1_ref, w2_ref, b2_ref, x_ref, o_ref):
    # x_ref: (2, TR, 128) f32 in VMEM; o_ref: (TR, 128) f32 in VMEM.
    # w1_ref (4,2), b1_ref (4,), w2_ref (1,4), b2_ref (1,) are f32 scalars in SMEM.
    x0 = x_ref[0]                                   # (TR, 128) feature 0
    x1 = x_ref[1]                                   # (TR, 128) feature 1
    out = jnp.full_like(x0, b2_ref[0])
    for j in range(4):                              # hidden dim = 4, unrolled at trace time
        h = jax.nn.sigmoid(w1_ref[j, 0] * x0 + w1_ref[j, 1] * x1 + b1_ref[j])
        out = out + w2_ref[0, j] * h
    o_ref[...] = jax.nn.sigmoid(out)


def binary_classifier_forward(x, w1, b1, w2, b2):
    """x: (B, 2) -> (B, 1). Weights use PyTorch nn.Linear layout:
    w1: (4, 2), b1: (4,), w2: (1, 4), b2: (1,)."""
    B = x.shape[0]
    rows = pl.cdiv(B, _LANES)
    tile_rows = rows if rows <= _MAX_ROWS_PER_TILE else _MAX_ROWS_PER_TILE
    rows_pad = pl.cdiv(rows, tile_rows) * tile_rows
    b_pad = rows_pad * _LANES

    # Lane-major layout: (B, 2) -> zero-pad batch -> (2, rows_pad, 128).
    x_f32 = x.astype(jnp.float32)
    x_lane = jnp.pad(x_f32, ((0, b_pad - B), (0, 0))).T.reshape(2, rows_pad, _LANES)

    smem = pl.BlockSpec(memory_space=pltpu.MemorySpace.SMEM)

    out_lane = pl.pallas_call(
        _mlp_kernel,
        out_shape=jax.ShapeDtypeStruct((rows_pad, _LANES), jnp.float32),
        grid=(rows_pad // tile_rows,),
        in_specs=[
            smem, smem, smem, smem,                                   # w1, b1, w2, b2
            pl.BlockSpec((2, tile_rows, _LANES), lambda i: (0, i, 0)),  # x tile
        ],
        out_specs=pl.BlockSpec((tile_rows, _LANES), lambda i: (i, 0)),
        compiler_params=pltpu.CompilerParams(
            dimension_semantics=("parallel",),
        ),
        cost_estimate=pl.CostEstimate(
            flops=20 * b_pad,
            transcendentals=5 * b_pad,
            bytes_accessed=12 * b_pad,
        ),
    )(
        w1.astype(jnp.float32),
        b1.astype(jnp.float32),
        w2.astype(jnp.float32),
        b2.astype(jnp.float32),
        x_lane,
    )

    # Back to the PyTorch-facing (B, 1) layout.
    return out_lane.reshape(-1)[:B].reshape(B, 1)


def _init_params(key):
    # Deterministic synthetic init (PyTorch-Linear-like uniform bounds).
    k1, k2, k3, k4 = jax.random.split(key, 4)
    bound1 = 1.0 / jnp.sqrt(2.0)  # fan_in = 2
    bound2 = 1.0 / jnp.sqrt(4.0)  # fan_in = 4
    w1 = jax.random.uniform(k1, (4, 2), jnp.float32, -bound1, bound1)
    b1 = jax.random.uniform(k2, (4,), jnp.float32, -bound1, bound1)
    w2 = jax.random.uniform(k3, (1, 4), jnp.float32, -bound2, bound2)
    b2 = jax.random.uniform(k4, (1,), jnp.float32, -bound2, bound2)
    return w1, b1, w2, b2


if __name__ == "__main__":
    key = jax.random.PRNGKey(0)
    k_x, k_p = jax.random.split(key)

    B = 8
    x = jax.random.normal(k_x, (B, 2), dtype=jnp.float32)
    w1, b1, w2, b2 = _init_params(k_p)

    out = jax.block_until_ready(binary_classifier_forward(x, w1, b1, w2, b2))

    # Pure-JAX reference (PyTorch semantics: y = sigmoid(sigmoid(x W1^T + b1) W2^T + b2)).
    ref = jax.nn.sigmoid(jax.nn.sigmoid(x @ w1.T + b1) @ w2.T + b2)
    assert out.shape == (B, 1)
    assert jnp.allclose(out, ref, atol=1e-5), "mismatch vs reference"

    print("KERNEL_OK")
</pallas_src>

<mosaic_0001>
module attributes {stable_mosaic.version = 11 : i64} {
  func.func @_mlp_kernel(%arg0: i32, %arg1: memref<4x2xf32, #tpu.memory_space<smem>>, %arg2: memref<4xf32, #tpu.memory_space<smem>>, %arg3: memref<1x4xf32, #tpu.memory_space<smem>>, %arg4: memref<1xf32, #tpu.memory_space<smem>>, %arg5: memref<2x1x128xf32, #tpu.memory_space<vmem>>, %arg6: memref<1x128xf32, #tpu.memory_space<vmem>>) attributes {dimension_semantics = [#tpu.dimension_semantics<parallel>], iteration_bounds = array<i64: 1>, scalar_prefetch = 0 : i64, scratch_operands = 0 : i64, tpu.core_type = #tpu.core_type<tc>, window_params = [{transform_indices = @transform_0, window_bounds = array<i64: 4, 2>}, {transform_indices = @transform_1, window_bounds = array<i64: 4>}, {transform_indices = @transform_2, window_bounds = array<i64: 1, 4>}, {transform_indices = @transform_3, window_bounds = array<i64: 1>}, {transform_indices = @transform_4, window_bounds = array<i64: 2, 1, 128>}, {transform_indices = @transform_5, window_bounds = array<i64: 1, 128>}]} {
    %c0 = arith.constant 0 : index
    %c0_0 = arith.constant 0 : index
    %c0_1 = arith.constant 0 : index
    %0 = vector.load %arg5[%c0, %c0_0, %c0_1] : memref<2x1x128xf32, #tpu.memory_space<vmem>>, vector<1x1x128xf32>
    %1 = vector.shape_cast %0 : vector<1x1x128xf32> to vector<1x128xf32>
    %c1 = arith.constant 1 : index
    %c0_2 = arith.constant 0 : index
    %c0_3 = arith.constant 0 : index
    %2 = vector.load %arg5[%c1, %c0_2, %c0_3] : memref<2x1x128xf32, #tpu.memory_space<vmem>>, vector<1x1x128xf32>
    %3 = vector.shape_cast %2 : vector<1x1x128xf32> to vector<1x128xf32>
    %c0_4 = arith.constant 0 : index
    %4 = memref.load %arg4[%c0_4] : memref<1xf32, #tpu.memory_space<smem>>
    %5 = vector.broadcast %4 : f32 to vector<1x128xf32>
    %c0_5 = arith.constant 0 : index
    %c0_6 = arith.constant 0 : index
    %6 = memref.load %arg1[%c0_5, %c0_6] : memref<4x2xf32, #tpu.memory_space<smem>>
    %7 = vector.broadcast %6 : f32 to vector<1x128xf32>
    %8 = arith.mulf %7, %1 : vector<1x128xf32>
    %c0_7 = arith.constant 0 : index
    %c1_8 = arith.constant 1 : index
    %9 = memref.load %arg1[%c0_7, %c1_8] : memref<4x2xf32, #tpu.memory_space<smem>>
    %10 = vector.broadcast %9 : f32 to vector<1x128xf32>
    %11 = arith.mulf %10, %3 : vector<1x128xf32>
    %12 = arith.addf %8, %11 : vector<1x128xf32>
    %c0_9 = arith.constant 0 : index
    %13 = memref.load %arg2[%c0_9] : memref<4xf32, #tpu.memory_space<smem>>
    %14 = vector.broadcast %13 : f32 to vector<1x128xf32>
    %15 = arith.addf %12, %14 : vector<1x128xf32>
    %16 = arith.negf %15 : vector<1x128xf32>
    %17 = math.exp %16 : vector<1x128xf32>
    %cst = arith.constant 1.000000e+00 : f32
    %18 = vector.broadcast %cst : f32 to vector<1x128xf32>
    %19 = arith.addf %18, %17 : vector<1x128xf32>
    %20 = arith.divf %18, %19 : vector<1x128xf32>
    %c0_10 = arith.constant 0 : index
    %c0_11 = arith.constant 0 : index
    %21 = memref.load %arg3[%c0_10, %c0_11] : memref<1x4xf32, #tpu.memory_space<smem>>
    %22 = vector.broadcast %21 : f32 to vector<1x128xf32>
    %23 = arith.mulf %22, %20 : vector<1x128xf32>
    %24 = arith.addf %5, %23 : vector<1x128xf32>
    %c1_12 = arith.constant 1 : index
    %c0_13 = arith.constant 0 : index
    %25 = memref.load %arg1[%c1_12, %c0_13] : memref<4x2xf32, #tpu.memory_space<smem>>
    %26 = vector.broadcast %25 : f32 to vector<1x128xf32>
    %27 = arith.mulf %26, %1 : vector<1x128xf32>
    %c1_14 = arith.constant 1 : index
    %c1_15 = arith.constant 1 : index
    %28 = memref.load %arg1[%c1_14, %c1_15] : memref<4x2xf32, #tpu.memory_space<smem>>
    %29 = vector.broadcast %28 : f32 to vector<1x128xf32>
    %30 = arith.mulf %29, %3 : vector<1x128xf32>
    %31 = arith.addf %27, %30 : vector<1x128xf32>
    %c1_16 = arith.constant 1 : index
    %32 = memref.load %arg2[%c1_16] : memref<4xf32, #tpu.memory_space<smem>>
    %33 = vector.broadcast %32 : f32 to vector<1x128xf32>
    %34 = arith.addf %31, %33 : vector<1x128xf32>
    %35 = arith.negf %34 : vector<1x128xf32>
    %36 = math.exp %35 : vector<1x128xf32>
    %cst_17 = arith.constant 1.000000e+00 : f32
    %37 = vector.broadcast %cst_17 : f32 to vector<1x128xf32>
    %38 = arith.addf %37, %36 : vector<1x128xf32>
    %39 = arith.divf %37, %38 : vector<1x128xf32>
    %c0_18 = arith.constant 0 : index
    %c1_19 = arith.constant 1 : index
    %40 = memref.load %arg3[%c0_18, %c1_19] : memref<1x4xf32, #tpu.memory_space<smem>>
    %41 = vector.broadcast %40 : f32 to vector<1x128xf32>
    %42 = arith.mulf %41, %39 : vector<1x128xf32>
    %43 = arith.addf %24, %42 : vector<1x128xf32>
    %c2 = arith.constant 2 : index
    %c0_20 = arith.constant 0 : index
    %44 = memref.load %arg1[%c2, %c0_20] : memref<4x2xf32, #tpu.memory_space<smem>>
    %45 = vector.broadcast %44 : f32 to vector<1x128xf32>
    %46 = arith.mulf %45, %1 : vector<1x128xf32>
    %c2_21 = arith.constant 2 : index
    %c1_22 = arith.constant 1 : index
    %47 = memref.load %arg1[%c2_21, %c1_22] : memref<4x2xf32, #tpu.memory_space<smem>>
    %48 = vector.broadcast %47 : f32 to vector<1x128xf32>
    %49 = arith.mulf %48, %3 : vector<1x128xf32>
    %50 = arith.addf %46, %49 : vector<1x128xf32>
    %c2_23 = arith.constant 2 : index
    %51 = memref.load %arg2[%c2_23] : memref<4xf32, #tpu.memory_space<smem>>
    %52 = vector.broadcast %51 : f32 to vector<1x128xf32>
    %53 = arith.addf %50, %52 : vector<1x128xf32>
    %54 = arith.negf %53 : vector<1x128xf32>
    %55 = math.exp %54 : vector<1x128xf32>
    %cst_24 = arith.constant 1.000000e+00 : f32
    %56 = vector.broadcast %cst_24 : f32 to vector<1x128xf32>
    %57 = arith.addf %56, %55 : vector<1x128xf32>
    %58 = arith.divf %56, %57 : vector<1x128xf32>
    %c0_25 = arith.constant 0 : index
    %c2_26 = arith.constant 2 : index
    %59 = memref.load %arg3[%c0_25, %c2_26] : memref<1x4xf32, #tpu.memory_space<smem>>
    %60 = vector.broadcast %59 : f32 to vector<1x128xf32>
    %61 = arith.mulf %60, %58 : vector<1x128xf32>
    %62 = arith.addf %43, %61 : vector<1x128xf32>
    %c3 = arith.constant 3 : index
    %c0_27 = arith.constant 0 : index
    %63 = memref.load %arg1[%c3, %c0_27] : memref<4x2xf32, #tpu.memory_space<smem>>
    %64 = vector.broadcast %63 : f32 to vector<1x128xf32>
    %65 = arith.mulf %64, %1 : vector<1x128xf32>
    %c3_28 = arith.constant 3 : index
    %c1_29 = arith.constant 1 : index
    %66 = memref.load %arg1[%c3_28, %c1_29] : memref<4x2xf32, #tpu.memory_space<smem>>
    %67 = vector.broadcast %66 : f32 to vector<1x128xf32>
    %68 = arith.mulf %67, %3 : vector<1x128xf32>
    %69 = arith.addf %65, %68 : vector<1x128xf32>
    %c3_30 = arith.constant 3 : index
    %70 = memref.load %arg2[%c3_30] : memref<4xf32, #tpu.memory_space<smem>>
    %71 = vector.broadcast %70 : f32 to vector<1x128xf32>
    %72 = arith.addf %69, %71 : vector<1x128xf32>
    %73 = arith.negf %72 : vector<1x128xf32>
    %74 = math.exp %73 : vector<1x128xf32>
    %cst_31 = arith.constant 1.000000e+00 : f32
    %75 = vector.broadcast %cst_31 : f32 to vector<1x128xf32>
    %76 = arith.addf %75, %74 : vector<1x128xf32>
    %77 = arith.divf %75, %76 : vector<1x128xf32>
    %c0_32 = arith.constant 0 : index
    %c3_33 = arith.constant 3 : index
    %78 = memref.load %arg3[%c0_32, %c3_33] : memref<1x4xf32, #tpu.memory_space<smem>>
    %79 = vector.broadcast %78 : f32 to vector<1x128xf32>
    %80 = arith.mulf %79, %77 : vector<1x128xf32>
    %81 = arith.addf %62, %80 : vector<1x128xf32>
    %82 = arith.negf %81 : vector<1x128xf32>
    %83 = math.exp %82 : vector<1x128xf32>
    %cst_34 = arith.constant 1.000000e+00 : f32
    %84 = vector.broadcast %cst_34 : f32 to vector<1x128xf32>
    %85 = arith.addf %84, %83 : vector<1x128xf32>
    %86 = arith.divf %84, %85 : vector<1x128xf32>
    %c0_35 = arith.constant 0 : index
    %c0_36 = arith.constant 0 : index
    %87 = vector.load %arg6[%c0_35, %c0_36] : memref<1x128xf32, #tpu.memory_space<vmem>>, vector<1x128xf32>
    tpu.vector_store %arg6[%c0_35, %c0_36], %86 {strides = array<i32>} : memref<1x128xf32, #tpu.memory_space<vmem>>, vector<1x128xf32>,
    return
  }
  func.func @transform_0(%arg0: i32) -> (i32, i32) {
    %c0_i32 = arith.constant 0 : i32
    %c0_i32_0 = arith.constant 0 : i32
    %c0_i32_1 = arith.constant 0 : i32
    return %c0_i32, %c0_i32_0 : i32, i32
  }
  func.func @transform_1(%arg0: i32) -> i32 {
    %c0_i32 = arith.constant 0 : i32
    %c0_i32_0 = arith.constant 0 : i32
    return %c0_i32 : i32
  }
  func.func @transform_2(%arg0: i32) -> (i32, i32) {
    %c0_i32 = arith.constant 0 : i32
    %c0_i32_0 = arith.constant 0 : i32
    %c0_i32_1 = arith.constant 0 : i32
    return %c0_i32, %c0_i32_0 : i32, i32
  }
  func.func @transform_3(%arg0: i32) -> i32 {
    %c0_i32 = arith.constant 0 : i32
    %c0_i32_0 = arith.constant 0 : i32
    return %c0_i32 : i32
  }
  func.func @transform_4(%arg0: i32) -> (i32, i32, i32) {
    %c0_i32 = arith.constant 0 : i32
    %c0_i32_0 = arith.constant 0 : i32
    %c0_i32_1 = arith.constant 0 : i32
    return %c0_i32, %arg0, %c0_i32_0 : i32, i32, i32
  }
  func.func @transform_5(%arg0: i32) -> (i32, i32) {
    %c0_i32 = arith.constant 0 : i32
    %c0_i32_0 = arith.constant 0 : i32
    return %arg0, %c0_i32 : i32, i32
  }
}

</mosaic_0001>

<llo_original>
// kernel: tpu_custom_call.1
$region0: #{tpu_custom_call.1}
  #allocation0 [shape = 'u32[]', space=smem, size = 0x4, offset = 0x4, fixed_abs, tag = 'smem constant byte address 0x4 - core index']
  #allocation1 [shape = 'u32[72,128]{1,0:T(1,128)}', space=vmem, size = 0x9000, scoped, tag = 'internal scratch']
  #allocation2 [shape = 'f32[1]{0:T(128)S(6)}', space=smem, size = 0x200, scoped, tag = 'scoped memory for tpu_custom_call.1']
  %s0 = inlined_call_operand.vmem [shape: f32[4,2], index: 0, kind: input, shape index: {}]
  %s1 = inlined_call_operand.vmem [shape: f32[4], index: 1, kind: input, shape index: {}]
  %s2 = inlined_call_operand.vmem [shape: f32[1,4], index: 2, kind: input, shape index: {}]
  %s3 = inlined_call_operand.<no memory space> [shape: f32[1], index: 3, kind: input, shape index: {}]
  %s4 = inlined_call_operand.vmem [shape: f32[2,1,128], index: 4, kind: input, shape index: {}]
  %s5 = inlined_call_operand.hbm [shape: f32[1,128], index: 5, kind: output, shape index: {}]
  %s6 = sld [smem:[#allocation0]]
  $region42: #{tpu_custom_call.1} parent=0
    _
  %s8 = ssub.s32 1, %s6
  %s9 = scalar_select 0, %s8, %s6
  %10 = sst [smem:[#allocation2]] %s3
  $region1: #{tpu_custom_call.1} parent=0
    #allocation3 [shape = 'u8[2048]{0}', space=smem, size = 0x800, scoped, tag = 'input window, operand 0, single buffered']
    #allocation4 [shape = 's32[1]{0}', space=sflag, size = 0x4, scoped, tag = 'scoped memory for tpu_custom_call.1']
    #allocation5 [shape = 's32[1]{0}', space=sflag, size = 0x4, scoped, tag = 'scoped memory for tpu_custom_call.1']
    #allocation6 [shape = 'u8[512]{0}', space=smem, size = 0x200, scoped, tag = 'input window, operand 1, single buffered']
    #allocation7 [shape = 's32[1]{0}', space=sflag, size = 0x4, scoped, tag = 'scoped memory for tpu_custom_call.1']
    #allocation8 [shape = 'u8[512]{0}', space=smem, size = 0x200, scoped, tag = 'input window, operand 2, single buffered']
    #allocation9 [shape = 'u8[512]{0}', space=vmem, size = 0x400, scoped, tag = 'output window, operand 0, single buffered']
    %11 = vsyncpa [#allocation5], 0
    %12 = vsyncpa [#allocation7], 0
    %13 = vsyncpa [#allocation4], 0
    // Predicated region
    $region2: #{tpu_custom_call.1} parent=1 // pred_check
      _
    $region3: #{tpu_custom_call.1} parent=1 // pred_check_branch
      %15 = sbr.rel (0) target = $region5
    $region4: #{tpu_custom_call.1} parent=1 // pred_region
      %17 = vsyncadd [#allocation5], 0
      %s19 = sshll.u32 %s0, 4
      %s20 = int_to_ptr.vmem [resolvable:$true] %s19
      %22 = dma.vmem_to_smem %s20, 64, [#allocation3], [#allocation5]
    $region5: #{tpu_custom_call.1} parent=1 // pred_fallthru
      _
    // Predicated region
    $region6: #{tpu_custom_call.1} parent=1 // pred_check
      _
    $region7: #{tpu_custom_call.1} parent=1 // pred_check_branch
      %24 = sbr.rel (0) target = $region9
    $region8: #{tpu_custom_call.1} parent=1 // pred_region
      %26 = vsyncadd [#allocation7], 0
      %s28 = sshll.u32 %s1, 4
      %s29 = int_to_ptr.vmem [resolvable:$true] %s28
      %31 = dma.vmem_to_smem %s29, 16, [#allocation6], [#allocation7]
    $region9: #{tpu_custom_call.1} parent=1 // pred_fallthru
      _
    // Predicated region
    $region10: #{tpu_custom_call.1} parent=1 // pred_check
      _
    $region11: #{tpu_custom_call.1} parent=1 // pred_check_branch
      %33 = sbr.rel (0) target = $region13
    $region12: #{tpu_custom_call.1} parent=1 // pred_region
      %35 = vsyncadd [#allocation7], 0
      %s37 = sshll.u32 %s2, 4
      %s38 = int_to_ptr.vmem [resolvable:$true] %s37
      %40 = dma.vmem_to_smem %s38, 16, [#allocation8], [#allocation7]
    $region13: #{tpu_custom_call.1} parent=1 // pred_fallthru
      _
    // Predicated region
    $region14: #{tpu_custom_call.1} parent=1 // pred_check
      _
    $region15: #{tpu_custom_call.1} parent=1 // pred_check_branch
      %42 = sbr.rel (0) target = $region17
    $region16: #{tpu_custom_call.1} parent=1 // pred_region
      _
    $region17: #{tpu_custom_call.1} parent=1 // pred_fallthru
      _
    // Predicated region
    $region18: #{tpu_custom_call.1} parent=1 // pred_check
      _
    $region19: #{tpu_custom_call.1} parent=1 // pred_check_branch
      %44 = sbr.rel (0) target = $region21
    $region20: #{tpu_custom_call.1} parent=1 // pred_region
      _
    $region21: #{tpu_custom_call.1} parent=1 // pred_fallthru
      _
    // Predicated region
    $region22: #{tpu_custom_call.1} parent=1 // pred_check
      _
    $region23: #{tpu_custom_call.1} parent=1 // pred_check_branch
      %46 = sbr.rel (0) target = $region25
    $region24: #{tpu_custom_call.1} parent=1 // pred_region
      %48 = dma.done [#allocation5], 64
    $region25: #{tpu_custom_call.1} parent=1 // pred_fallthru
      _
    // Predicated region
    $region26: #{tpu_custom_call.1} parent=1 // pred_check
      _
    $region27: #{tpu_custom_call.1} parent=1 // pred_check_branch
      %50 = sbr.rel (0) target = $region29
    $region28: #{tpu_custom_call.1} parent=1 // pred_region
      %52 = dma.done [#allocation7], 16
    $region29: #{tpu_custom_call.1} parent=1 // pred_fallthru
      _
    // Predicated region
    $region30: #{tpu_custom_call.1} parent=1 // pred_check
      _
    $region31: #{tpu_custom_call.1} parent=1 // pred_check_branch
      %54 = sbr.rel (0) target = $region33
    $region32: #{tpu_custom_call.1} parent=1 // pred_region
      %56 = dma.done [#allocation7], 16
    $region33: #{tpu_custom_call.1} parent=1 // pred_fallthru
      _
    %57 = sfence
    %v58 = vld [vmem:[%s4] sm:$0x1]
    %s59 = scalar_lea.vmem %s4, 1
    %v60 = vld [vmem:[%s59] sm:$0x1]
    %s61 = sld [smem:[#allocation2]]
    %v62 = vstv %s61
    %s63 = sld [smem:[#allocation3]]
    %v64 = vstv %s63
    %v65 = vmul.f32 %v64, %v58
    %s66 = sld [smem:[#allocation3 + $0x1]]
    %v67 = vstv %s66
    %v68 = vmul.f32 %v67, %v60
    %v69 = vadd.f32 %v65, %v68
    %s70 = sld [smem:[#allocation6]]
    %v71 = vstv %s70
    %v72 = vadd.f32 %v69, %v71
    %v73 = vxor.u32 %v72, 2147483648
    %v74 = vmul.f32 %v73, 1.442695
    %v75 = vpow.pop %v74
    %v76 = vadd.f32 %v75, 1.0
    %v77 = vrcp.pop %v76
    %v78 = vmul.f32 %v76, %v77
    %v79 = vsub.f32 1.0, %v78
    %v80 = vmul.f32 %v77, %v79
    %v81 = vadd.f32 %v77, %v80
    %vm82 = vweird.f32 %v76
    %vm83 = vweird.f32 %v77
    %vm84 = vmor %vm82, %vm83
    %v85 = vsel %vm84, %v77, %v81
    %v86 = vand.u32 2147483647, %v76
    %vm87 = vcmp.eq.f32.partialorder %v86, 8.507059e+37
    %v88 = vand.u32 %v76, 2147483648
    %v89 = vor.u32 1.1754944e-38, %v88
    %v90 = vsel %vm87, %v89, %v85
    %v91 = vmul.f32 1.0, %v90
    %s92 = sld [smem:[#allocation8]]
    %v93 = vstv %s92
    %v94 = vmul.f32 %v93, %v91
    %v95 = vadd.f32 %v62, %v94
    %s96 = sld [smem:[#allocation3 + $0x80]]
    %v97 = vstv %s96
    %v98 = vmul.f32 %v97, %v58
    %s99 = sld [smem:[#allocation3 + $0x81]]
    %v100 = vstv %s99
    %v101 = vmul.f32 %v100, %v60
    %v102 = vadd.f32 %v98, %v101
    %s103 = sld [smem:[#allocation6 + $0x1]]
    %v104 = vstv %s103
    %v105 = vadd.f32 %v102, %v104
    %v106 = vxor.u32 %v105, 2147483648
    %v107 = vmul.f32 %v106, 1.442695
    %v108 = vpow.pop %v107
    %v109 = vadd.f32 %v108, 1.0
    %v110 = vrcp.pop %v109
    %v111 = vmul.f32 %v109, %v110
    %v112 = vsub.f32 1.0, %v111
    %v113 = vmul.f32 %v110, %v112
    %v114 = vadd.f32 %v110, %v113
    %vm115 = vweird.f32 %v109
    %vm116 = vweird.f32 %v110
    %vm117 = vmor %vm115, %vm116
    %v118 = vsel %vm117, %v110, %v114
    %v119 = vand.u32 2147483647, %v109
    %vm120 = vcmp.eq.f32.partialorder %v119, 8.507059e+37
    %v121 = vand.u32 %v109, 2147483648
    %v122 = vor.u32 1.1754944e-38, %v121
    %v123 = vsel %vm120, %v122, %v118
    %v124 = vmul.f32 1.0, %v123
    %s125 = sld [smem:[#allocation8 + $0x1]]
    %v126 = vstv %s125
    %v127 = vmul.f32 %v126, %v124
    %v128 = vadd.f32 %v95, %v127
    %s129 = sld [smem:[#allocation3 + $0x100]]
    %v130 = vstv %s129
    %v131 = vmul.f32 %v130, %v58
    %s132 = sld [smem:[#allocation3 + $0x101]]
    %v133 = vstv %s132
    %v134 = vmul.f32 %v133, %v60
    %v135 = vadd.f32 %v131, %v134
    %s136 = sld [smem:[#allocation6 + $0x2]]
    %v137 = vstv %s136
    %v138 = vadd.f32 %v135, %v137
    %v139 = vxor.u32 %v138, 2147483648
    %v140 = vmul.f32 %v139, 1.442695
    %v141 = vpow.pop %v140
    %v142 = vadd.f32 %v141, 1.0
    %v143 = vrcp.pop %v142
    %v144 = vmul.f32 %v142, %v143
    %v145 = vsub.f32 1.0, %v144
    %v146 = vmul.f32 %v143, %v145
    %v147 = vadd.f32 %v143, %v146
    %vm148 = vweird.f32 %v142
    %vm149 = vweird.f32 %v143
    %vm150 = vmor %vm148, %vm149
    %v151 = vsel %vm150, %v143, %v147
    %v152 = vand.u32 2147483647, %v142
    %vm153 = vcmp.eq.f32.partialorder %v152, 8.507059e+37
    %v154 = vand.u32 %v142, 2147483648
    %v155 = vor.u32 1.1754944e-38, %v154
    %v156 = vsel %vm153, %v155, %v151
    %v157 = vmul.f32 1.0, %v156
    %s158 = sld [smem:[#allocation8 + $0x2]]
    %v159 = vstv %s158
    %v160 = vmul.f32 %v159, %v157
    %v161 = vadd.f32 %v128, %v160
    %s162 = sld [smem:[#allocation3 + $0x180]]
    %v163 = vstv %s162
    %v164 = vmul.f32 %v163, %v58
    %s165 = sld [smem:[#allocation3 + $0x181]]
    %v166 = vstv %s165
    %v167 = vmul.f32 %v166, %v60
    %v168 = vadd.f32 %v164, %v167
    %s169 = sld [smem:[#allocation6 + $0x3]]
    %v170 = vstv %s169
    %v171 = vadd.f32 %v168, %v170
    %v172 = vxor.u32 %v171, 2147483648
    %v173 = vmul.f32 %v172, 1.442695
    %v174 = vpow.pop %v173
    %v175 = vadd.f32 %v174, 1.0
    %v176 = vrcp.pop %v175
    %v177 = vmul.f32 %v175, %v176
    %v178 = vsub.f32 1.0, %v177
    %v179 = vmul.f32 %v176, %v178
    %v180 = vadd.f32 %v176, %v179
    %vm181 = vweird.f32 %v175
    %vm182 = vweird.f32 %v176
    %vm183 = vmor %vm181, %vm182
    %v184 = vsel %vm183, %v176, %v180
    %v185 = vand.u32 2147483647, %v175
    %vm186 = vcmp.eq.f32.partialorder %v185, 8.507059e+37
    %v187 = vand.u32 %v175, 2147483648
    %v188 = vor.u32 1.1754944e-38, %v187
    %v189 = vsel %vm186, %v188, %v184
    %v190 = vmul.f32 1.0, %v189
    %s191 = sld [smem:[#allocation8 + $0x3]]
    %v192 = vstv %s191
    %v193 = vmul.f32 %v192, %v190
    %v194 = vadd.f32 %v161, %v193
    %v195 = vxor.u32 %v194, 2147483648
    %v196 = vmul.f32 %v195, 1.442695
    %v197 = vpow.pop %v196
    %v198 = vadd.f32 %v197, 1.0
    %v199 = vrcp.pop %v198
    %v200 = vmul.f32 %v198, %v199
    %v201 = vsub.f32 1.0, %v200
    %v202 = vmul.f32 %v199, %v201
    %v203 = vadd.f32 %v199, %v202
    %vm204 = vweird.f32 %v198
    %vm205 = vweird.f32 %v199
    %vm206 = vmor %vm204, %vm205
    %v207 = vsel %vm206, %v199, %v203
    %v208 = vand.u32 2147483647, %v198
    %vm209 = vcmp.eq.f32.partialorder %v208, 8.507059e+37
    %v210 = vand.u32 %v198, 2147483648
    %v211 = vor.u32 1.1754944e-38, %v210
    %v212 = vsel %vm209, %v211, %v207
    %v213 = vmul.f32 1.0, %v212
    %214 = vst [vmem:[#allocation9] sm:$0x1] %v213
    // Predicated region
    $region34: #{tpu_custom_call.1} parent=1 // pred_check
      _
    $region35: #{tpu_custom_call.1} parent=1 // pred_check_branch
      %216 = sbr.rel (0) target = $region37
    $region36: #{tpu_custom_call.1} parent=1 // pred_region
      %218 = vsyncadd [#allocation4], 0
      %s220 = sshll.u32 [#allocation9], 4
      %s221 = int_to_ptr.vmem [resolvable:$true] %s220
      %s222 = sshll.u32 %s5, 4
      %s223 = int_to_ptr.hbm [resolvable:$true] %s222
      %225 = dma.vmem_to_hbm [thread:$0]  %s221, 16, %s223, [#allocation4]
    $region37: #{tpu_custom_call.1} parent=1 // pred_fallthru
      _
    // Predicated region
    $region38: #{tpu_custom_call.1} parent=1 // pred_check
      _
    $region39: #{tpu_custom_call.1} parent=1 // pred_check_branch
      %227 = sbr.rel (0) target = $region41
    $region40: #{tpu_custom_call.1} parent=1 // pred_region
      %229 = dma.done [#allocation4], 16
    $region41: #{tpu_custom_call.1} parent=1 // pred_fallthru
      _
    %230 = vsyncpa [#allocation4], 1
    %231 = vsyncpa [#allocation5], 1
    %232 = vsyncpa [#allocation7], 1

</llo_original>
